<compile_context>
chip_gen: v7x
topology: tpu7x:2x2x1
jax: 0.10.0
libtpu: 0.0.40
codegen_flags: <defaults>
</compile_context>

<pallas_src>
import math
import numpy as np
import jax
import jax.numpy as jnp
from jax.experimental import pallas as pl
from jax.experimental.pallas import tpu as pltpu


# ------------------------------------------------------------------ hardware budgets
def _tpu_budget():
    # v5e/v6e: 128 MiB VMEM -> ~96 MiB scoped limit, 1024-row tiles.
    # v7x:      64 MiB VMEM -> 48 MiB scoped limit,   512-row tiles.
    cap = 64 * 1024 * 1024
    try:
        info = pltpu.get_tpu_info()
        cap = int(getattr(info, "vmem_capacity_bytes", cap))
    except Exception:
        pass
    vmem_limit = min(int(cap * 3 // 4), 100 * 1024 * 1024)
    max_tile = 512 if cap <= 64 * 1024 * 1024 else 1024
    return vmem_limit, max_tile


VMEM_LIMIT, MAX_TILE = _tpu_budget()


# ----------------------------------------------------------------------------- helpers
def _dot(a, b):
    # a @ b on the MXU, f32 accumulation (operands already in their storage dtype)
    return jnp.dot(a, b, preferred_element_type=jnp.float32)


def _bdot(a, b):
    # bf16 x bf16 -> f32: single-pass MXU format on all generations
    return jnp.dot(a.astype(jnp.bfloat16), b.astype(jnp.bfloat16),
                   preferred_element_type=jnp.float32)


def _dotT(a, b):
    # a.T @ b (contract leading dims) — gather/scatter via one-hot matrices
    return jax.lax.dot_general(a, b, (((0,), (0,)), ((), ())),
                               preferred_element_type=jnp.float32)


def _round_up(a, m):
    return ((a + m - 1) // m) * m


# --------------------------------------------------------------------- Pallas kernels
def node_proj_kernel(x_ref, w0_ref, b0_ref, g_ref, be_ref, rm_ref, rv_ref,
                     wq_ref, bq_ref, wkv_ref, bkv_ref, wsk_ref, bsk_ref,
                     q_ref, kv_ref, xr_ref):
    # init_lin: Linear + LeakyReLU(0.02) + NodeLevelBatchNorm (eval); Dropout(0.3) eval == id
    h = _bdot(x_ref[...], w0_ref[...]) + b0_ref[...]
    h = jnp.where(h >= 0.0, h, 0.02 * h)
    h = (h - rm_ref[...]) * jax.lax.rsqrt(rv_ref[...] + 1e-5) * g_ref[...] + be_ref[...]
    # fused TransformerConv projections: q (bf16), pre-sliced [k|v] (bf16), lin_skip (f32)
    q_ref[...] = (_bdot(h, wq_ref[...]) + bq_ref[...]).astype(jnp.bfloat16)
    kv_ref[...] = (_bdot(h, wkv_ref[...]) + bkv_ref[...]).astype(jnp.bfloat16)
    xr_ref[...] = _bdot(h, wsk_ref[...]) + bsk_ref[...]


def make_edge_kv_kernel(HC):
    def kernel(S_ref, ea_ref, kv_ref, we_ref, kvj_ref):
        e = _bdot(ea_ref[...], we_ref[...])                  # lin_edge (bias=False)   [tE, HC]
        gathered = _dot(S_ref[...], kv_ref[...])             # bf16 x bf16 gather of [k|v] at src
        kvj_ref[:, 0:HC] = (gathered[:, 0:HC] + e).astype(jnp.bfloat16)
        kvj_ref[:, HC:2 * HC] = (gathered[:, HC:2 * HC] + e).astype(jnp.bfloat16)
    return kernel


def make_attn_kernel(heads, HC):
    # PyG TransformerConv(heads, concat=False, beta=True, edge_dim=...), eval mode
    def kernel(Tt_ref, q_ref, xr_ref, kvj_ref, hm_ref, hmt_ref, mm_ref,
               wba_ref, wbb_ref, wbc_ref, o_ref):
        tbt = Tt_ref[...]                                    # [tN, E] bf16 tgt one-hot (transposed)
        q_i = _dotT(tbt, q_ref[...])                         # query gathered at targets   [E, HC]
        kj = kvj_ref[:, 0:HC]                                # key_j   (already + lin_edge), bf16
        vj = kvj_ref[:, HC:2 * HC]                           # value_j (already + lin_edge), bf16
        # per-head scores summed via a constant head-mask matmul (1/sqrt(C) folded in)
        alpha = _bdot(q_i * kj, hm_ref[...])                 # [E, heads]
        # softmax shift: one per-tile, per-head max (valid per-segment-constant shift).
        # TODO(synk): for score ranges spanning >~80, restore an exact per-target shift via a
        # masked segment max + `shift = tbt.T @ max_cols` matmul gather.
        m = jnp.max(alpha, axis=0, keepdims=True)            # [1, heads]
        expa = jnp.exp(alpha - m)                            # <= 1, finite (padded edges masked below)
        expa_w = _bdot(expa, hmt_ref[...])                   # per-head weight over its C lanes [E, HC]
        num = _dot(tbt, (expa_w * vj).astype(jnp.bfloat16))  # scatter-sum at targets     [tN, HC]
        den = _dot(tbt, expa.astype(jnp.bfloat16))           # [tN, heads]
        den_w = _bdot(den, hmt_ref[...])                     # [tN, HC]
        out_h = num * pl.reciprocal(den_w + 1e-9, approx=False)   # isolated targets -> 0, no NaN
        out = _bdot(out_h, mm_ref[...])                      # head mean (concat=False)   [tN, hid]
        # beta gate: lin_beta(cat[out, x_r, out - x_r]) as VPU row reductions
        xr = xr_ref[...]
        logit = jnp.sum(out * wba_ref[...] + xr * wbb_ref[...] + (out - xr) * wbc_ref[...],
                        axis=-1, keepdims=True)
        beta = jax.nn.sigmoid(logit)
        o_ref[...] = beta * xr + (1.0 - beta) * out
    return kernel


def gine_stack_kernel(h0_ref, S_hbm, Tt_hbm, ea_ref,
                      wl_ref, bl_ref, w1_ref, b1_ref, w2_ref, b2_ref,
                      eps_ref, g_ref, be_ref, rm_ref, rv_ref,
                      o_ref, h_vmem, s_vmem, t_vmem, sem):
    # all GINE blocks fused: grid axis = layer, node features resident in VMEM scratch.
    # S / T_t are single-buffered: DMA'd once from HBM (pl.ANY) into VMEM scratch at layer 0.
    l = pl.program_id(0)

    @pl.when(l == 0)
    def _():
        cps = pltpu.make_async_copy(S_hbm, s_vmem, sem.at[0])
        cpt = pltpu.make_async_copy(Tt_hbm, t_vmem, sem.at[1])
        cps.start()
        cpt.start()
        cps.wait()
        cpt.wait()
        h_vmem[...] = h0_ref[...]

    h = h_vmem[...]
    e = _bdot(ea_ref[...], wl_ref[0]) + bl_ref[0]                            # GINEConv.lin(edge_attr)
    msg = jnp.maximum(_dot(s_vmem[...], h.astype(jnp.bfloat16)) + e, 0.0)    # (x_j + e).relu()
    agg = _dot(t_vmem[...], msg.astype(jnp.bfloat16))                        # sum aggregation at targets
    u = agg + (1.0 + eps_ref[0]) * h
    # Conv1dBlock on a length-1 sequence == two Linears (center taps) with ReLU in between
    t1 = jnp.maximum(_bdot(u, w1_ref[0]) + b1_ref[0], 0.0)
    y = _bdot(t1, w2_ref[0]) + b2_ref[0] + h                                 # residual around GINEConv
    y = (y - rm_ref[0]) * jax.lax.rsqrt(rv_ref[0] + 1e-5) * g_ref[0] + be_ref[0]
    h_new = jnp.where(y >= 0.0, y, 0.02 * y)                                 # LeakyReLU; Dropout eval == id
    h_vmem[...] = h_new

    # TODO(synk): on v7x, add a parallel node-tile axis (or core_map) so the dense per-node
    # section of each layer uses both TensorCores.
    @pl.when(l == pl.num_programs(0) - 1)
    def _():
        o_ref[...] = h_new


def pool_out_kernel(h_ref, B_ref, wg1_ref, bg1_ref, wg2_ref, bg2_ref,
                    wo_ref, bo_ref, o_ref, num_acc, den_acc):
    # GlobalAttention pooling + out_lin.  gate_nn ends in Sigmoid, so the softmax numerator
    # exp(sigmoid(.)) is bounded in (1, e): no max shift needed; per-graph sums accumulate
    # tile-by-tile.
    i = pl.program_id(0)

    @pl.when(i == 0)
    def _():
        num_acc[...] = jnp.zeros_like(num_acc)
        den_acc[...] = jnp.zeros_like(den_acc)

    h = h_ref[...]
    g = _bdot(h, wg1_ref[...]) + bg1_ref[...]
    g = jnp.where(g >= 0.0, g, 0.02 * g)
    logit = jnp.sum(g * wg2_ref[...], axis=-1, keepdims=True) + bg2_ref[...]   # hid//2 -> 1 on the VPU
    gate = jnp.exp(jax.nn.sigmoid(logit))
    bm = B_ref[...].astype(jnp.float32)                                        # [tN, G] graph one-hot
    den_acc[...] += _dotT(bm, gate)
    num_acc[...] += _dotT(bm, gate * h)

    @pl.when(i == pl.num_programs(0) - 1)
    def _():
        pooled = num_acc[...] * pl.reciprocal(den_acc[...] + 1e-9, approx=False)
        o_ref[...] = _bdot(pooled, wo_ref[...]) + bo_ref[...]


# ------------------------------------------------------------------------ host "glue"
def laplacian_pe(edge_index, batch, N, k):
    # TODO(synk): torch.linalg.eigh has no Pallas equivalent; PE computed with NumPy eigh.
    pos = np.zeros((N, k), np.float32)
    for gid in np.unique(batch):
        idx = np.where(batch == gid)[0]
        n = len(idx)
        if n == 0:
            continue
        remap = {int(old): i for i, old in enumerate(idx)}
        keep = np.isin(edge_index[0], idx) & np.isin(edge_index[1], idx)
        src = np.array([remap[int(s)] for s in edge_index[0][keep]], dtype=np.int64)
        dst = np.array([remap[int(d)] for d in edge_index[1][keep]], dtype=np.int64)
        A = np.zeros((n, n), np.float32)
        A[src, dst] = 1.0
        deg = np.zeros(n, np.float32)
        np.add.at(deg, src, 1.0)
        deg = deg + 1e-6
        dinv = deg ** -0.5
        L = np.eye(n, dtype=np.float32) - dinv[:, None] * A * dinv[None, :]
        _, V = np.linalg.eigh(L)
        eig = V[:, :min(k, V.shape[1])].astype(np.float32)
        if eig.shape[1] < k:
            eig = np.concatenate([eig, np.zeros((n, k - eig.shape[1]), np.float32)], axis=1)
        pos[idx] = eig
    return jnp.asarray(pos)


def init_params(key, in_dim, hid, out_dim, edge_dim, n_layers, pe_dim, heads):
    keys = iter(jax.random.split(key, 128))

    def lin(kin, kout, scale=0.1):
        return jax.random.normal(next(keys), (kin, kout), jnp.float32) * scale

    def vec(n, scale=0.1):
        return jax.random.normal(next(keys), (1, n), jnp.float32) * scale

    p = {}
    F = in_dim + pe_dim
    HC = heads * hid
    p['init_w'], p['init_b'] = lin(F, hid), vec(hid)
    p['init_bn'] = (1.0 + vec(hid), vec(hid), vec(hid), 1.0 + jnp.abs(vec(hid)))
    # TransformerConv: q projection, pre-sliced [k|v] projection, skip, edge and beta weights
    p['wq'], p['bq'] = lin(hid, HC), vec(HC)
    wk, bk = lin(hid, HC), vec(HC)
    wv, bv = lin(hid, HC), vec(HC)
    p['wkv'] = jnp.concatenate([wk, wv], axis=1)             # [hid, 2*HC]
    p['bkv'] = jnp.concatenate([bk, bv], axis=1)
    p['we'] = lin(edge_dim, HC)                              # lin_edge (no bias)
    p['wskip'], p['bskip'] = lin(hid, hid), vec(hid)
    wbeta = lin(3 * hid, 1)                                  # lin_beta (no bias), split for VPU use
    p['wb_out'] = jnp.transpose(wbeta[0:hid])
    p['wb_skip'] = jnp.transpose(wbeta[hid:2 * hid])
    p['wb_diff'] = jnp.transpose(wbeta[2 * hid:3 * hid])
    # GINE blocks: per-layer weights stacked on a leading layer axis (single fused kernel)
    layers = []
    for _ in range(n_layers):
        # torch Conv1d weights are [out, in, 3]; the length-1 conv uses only the center tap
        conv1 = jax.random.normal(next(keys), (hid, hid, 3), jnp.float32) * 0.1
        conv2 = jax.random.normal(next(keys), (hid, hid, 3), jnp.float32) * 0.1
        layers.append(dict(
            wl=lin(edge_dim, hid), bl=vec(hid),
            w1=jnp.transpose(conv1[:, :, 1]), b1=vec(hid),
            w2=jnp.transpose(conv2[:, :, 1]), b2=vec(hid),
            eps=jnp.full((1, 1), 0.1, jnp.float32),
            gamma=1.0 + vec(hid), beta=vec(hid),
            mean=vec(hid), var=1.0 + jnp.abs(vec(hid))))
    p['gine'] = {k: jnp.stack([lp[k] for lp in layers], axis=0) for k in layers[0]}
    p['wg1'], p['bg1'] = lin(hid, hid // 2), vec(hid // 2)
    p['wg2_row'] = jnp.transpose(lin(hid // 2, 1))           # gate hid//2 -> 1 as a VPU row reduction
    p['bg2'] = vec(1)
    p['wout'], p['bout'] = lin(hid, out_dim), vec(out_dim)
    return p


# ---------------------------------------------------------------------------- wrapper
def graph_encoder_forward(params, x, edge_index, edge_attr, batch,
                          *, pe_dim, heads, hid, out_dim, edge_dim, n_layers,
                          max_tile=MAX_TILE):
    N = int(x.shape[0])
    E = int(edge_index.shape[1])
    G = int(np.max(np.asarray(batch))) + 1
    C = hid
    HC = heads * C

    pos = laplacian_pe(np.asarray(edge_index), np.asarray(batch), N, pe_dim)
    xin = jnp.concatenate([jnp.asarray(x, jnp.float32), pos], axis=1)
    F = xin.shape[1]

    # ---- pad rows so every grid divides exactly (large tiles amortise grid overhead) ----
    node_tile = min(max_tile, _round_up(N, 16))
    N_pad = _round_up(N, node_tile)
    edge_tile = min(max_tile, _round_up(E, 16))
    E_pad = _round_up(E, edge_tile)
    n_grid = N_pad // node_tile
    e_grid = E_pad // edge_tile

    xin = jnp.pad(xin, ((0, N_pad - N), (0, 0)))
    ea = jnp.pad(jnp.asarray(edge_attr, jnp.float32), ((0, E_pad - E), (0, 0)))
    src = np.full((E_pad,), -1, np.int32)
    tgt = np.full((E_pad,), -1, np.int32)
    src[:E] = np.asarray(edge_index[0])
    tgt[:E] = np.asarray(edge_index[1])
    bat = np.full((N_pad,), -1, np.int32)
    bat[:N] = np.asarray(batch)

    # TODO(synk): at production scale replace the dense one-hot gather/scatter matrices with
    # index-based gather/scatter (scalar-prefetch src/tgt in SMEM + DMA gather, scatter into a
    # VMEM accumulator) to drop the O(E*N) memory/FLOPs; dense bf16 kept as small-graph path.
    S = jax.nn.one_hot(jnp.asarray(src), N_pad, dtype=jnp.bfloat16)          # [E, N] src one-hot
    node_ids = jnp.arange(N_pad, dtype=jnp.int32)
    T_t = (node_ids[:, None] == jnp.asarray(tgt)[None, :]).astype(jnp.bfloat16)  # [N, E] tgt one-hot^T
    Bm = jax.nn.one_hot(jnp.asarray(bat), G, dtype=jnp.bfloat16)             # [N, G] graph one-hot

    # constant per-head mask matrices (1/sqrt(C) and 1/heads folded in)
    hm = np.zeros((HC, heads), np.float32)
    hmt = np.zeros((heads, HC), np.float32)
    mmean = np.zeros((HC, C), np.float32)
    for h in range(heads):
        hm[h * C:(h + 1) * C, h] = 1.0 / math.sqrt(C)
        hmt[h, h * C:(h + 1) * C] = 1.0
        mmean[h * C:(h + 1) * C, :] = np.eye(C, dtype=np.float32) / heads
    hm, hmt, mmean = jnp.asarray(hm), jnp.asarray(hmt), jnp.asarray(mmean)

    cparams_par = pltpu.CompilerParams(dimension_semantics=("parallel",),
                                       vmem_limit_bytes=VMEM_LIMIT)
    cparams_arb = pltpu.CompilerParams(dimension_semantics=("arbitrary",),
                                       vmem_limit_bytes=VMEM_LIMIT)

    # ---- 1. init_lin + fused q / [k|v] / skip projections (node-tiled, parallel) --------
    bn_g, bn_b, bn_m, bn_v = params['init_bn']
    q, kv, xr = pl.pallas_call(
        node_proj_kernel,
        out_shape=(jax.ShapeDtypeStruct((N_pad, HC), jnp.bfloat16),
                   jax.ShapeDtypeStruct((N_pad, 2 * HC), jnp.bfloat16),
                   jax.ShapeDtypeStruct((N_pad, hid), jnp.float32)),
        grid=(n_grid,),
        in_specs=[pl.BlockSpec((node_tile, F), lambda i: (i, 0)),
                  pl.BlockSpec((F, hid), lambda i: (0, 0)),
                  pl.BlockSpec((1, hid), lambda i: (0, 0)),
                  pl.BlockSpec((1, hid), lambda i: (0, 0)),
                  pl.BlockSpec((1, hid), lambda i: (0, 0)),
                  pl.BlockSpec((1, hid), lambda i: (0, 0)),
                  pl.BlockSpec((1, hid), lambda i: (0, 0)),
                  pl.BlockSpec((hid, HC), lambda i: (0, 0)),
                  pl.BlockSpec((1, HC), lambda i: (0, 0)),
                  pl.BlockSpec((hid, 2 * HC), lambda i: (0, 0)),
                  pl.BlockSpec((1, 2 * HC), lambda i: (0, 0)),
                  pl.BlockSpec((hid, hid), lambda i: (0, 0)),
                  pl.BlockSpec((1, hid), lambda i: (0, 0))],
        out_specs=(pl.BlockSpec((node_tile, HC), lambda i: (i, 0)),
                   pl.BlockSpec((node_tile, 2 * HC), lambda i: (i, 0)),
                   pl.BlockSpec((node_tile, hid), lambda i: (i, 0))),
        compiler_params=cparams_par,
    )(xin, params['init_w'], params['init_b'], bn_g, bn_b, bn_m, bn_v,
      params['wq'], params['bq'], params['wkv'], params['bkv'],
      params['wskip'], params['bskip'])

    # ---- 2. edge gather of k/v + lin_edge (edge-tiled, parallel, bf16 operands) ---------
    kvj = pl.pallas_call(
        make_edge_kv_kernel(HC),
        out_shape=jax.ShapeDtypeStruct((E_pad, 2 * HC), jnp.bfloat16),
        grid=(e_grid,),
        in_specs=[pl.BlockSpec((edge_tile, N_pad), lambda i: (i, 0)),
                  pl.BlockSpec((edge_tile, edge_dim), lambda i: (i, 0)),
                  pl.BlockSpec((N_pad, 2 * HC), lambda i: (0, 0)),   # pre-sliced bf16 [k|v], resident
                  pl.BlockSpec((edge_dim, HC), lambda i: (0, 0))],
        out_specs=pl.BlockSpec((edge_tile, 2 * HC), lambda i: (i, 0)),
        compiler_params=cparams_par,
    )(S, ea, kv, params['we'])

    # ---- 3. attention aggregation + beta skip (node-tiled over targets, parallel) -------
    # TODO(synk): for E_pad >~ 16K on v7x, add an inner "arbitrary" E axis with online-softmax
    # accumulation instead of keeping the full kvj / T_t row block resident.
    attn_cost = pl.CostEstimate(
        flops=int(4 * E_pad * N_pad * HC + 8 * E_pad * HC * heads
                  + 2 * N_pad * HC * (heads + hid)),
        transcendentals=int(E_pad * heads * n_grid + N_pad),
        bytes_accessed=int(2 * N_pad * E_pad + 2 * E_pad * 2 * HC * n_grid
                           + 4 * N_pad * (3 * hid) + 2 * N_pad * HC))
    h1 = pl.pallas_call(
        make_attn_kernel(heads, HC),
        out_shape=jax.ShapeDtypeStruct((N_pad, hid), jnp.float32),
        grid=(n_grid,),
        in_specs=[pl.BlockSpec((node_tile, E_pad), lambda i: (i, 0)),   # tgt one-hot^T, contiguous rows
                  pl.BlockSpec((node_tile, HC), lambda i: (i, 0)),      # q (bf16)
                  pl.BlockSpec((node_tile, hid), lambda i: (i, 0)),     # lin_skip(x)
                  pl.BlockSpec((E_pad, 2 * HC), lambda i: (0, 0)),      # gathered k_j|v_j (bf16, resident)
                  pl.BlockSpec((HC, heads), lambda i: (0, 0)),
                  pl.BlockSpec((heads, HC), lambda i: (0, 0)),
                  pl.BlockSpec((HC, hid), lambda i: (0, 0)),
                  pl.BlockSpec((1, hid), lambda i: (0, 0)),
                  pl.BlockSpec((1, hid), lambda i: (0, 0)),
                  pl.BlockSpec((1, hid), lambda i: (0, 0))],
        out_specs=pl.BlockSpec((node_tile, hid), lambda i: (i, 0)),
        compiler_params=cparams_par,
        cost_estimate=attn_cost,
    )(T_t, q, xr, kvj, hm, hmt, mmean,
      params['wb_out'], params['wb_skip'], params['wb_diff'])

    # ---- 4. all GINE blocks fused: grid over layers, h resident in VMEM scratch ---------
    Lp = params['gine']
    gine_cost = pl.CostEstimate(
        flops=int(n_layers * (4 * E_pad * N_pad * hid + 4 * N_pad * hid * hid
                              + 2 * E_pad * edge_dim * hid)),
        transcendentals=0,
        bytes_accessed=int(2 * 2 * E_pad * N_pad + 4 * (2 * N_pad * hid + E_pad * edge_dim)
                           + 4 * n_layers * (edge_dim + 2 * hid + 6) * hid))
    h2 = pl.pallas_call(
        gine_stack_kernel,
        out_shape=jax.ShapeDtypeStruct((N_pad, hid), jnp.float32),
        grid=(n_layers,),
        in_specs=[pl.BlockSpec((N_pad, hid), lambda l: (0, 0)),
                  pl.BlockSpec(memory_space=pl.ANY),                    # S   [E,N] bf16, DMA'd once
                  pl.BlockSpec(memory_space=pl.ANY),                    # T^T [N,E] bf16, DMA'd once
                  pl.BlockSpec((E_pad, edge_dim), lambda l: (0, 0)),
                  pl.BlockSpec((1, edge_dim, hid), lambda l: (l, 0, 0)),
                  pl.BlockSpec((1, 1, hid), lambda l: (l, 0, 0)),
                  pl.BlockSpec((1, hid, hid), lambda l: (l, 0, 0)),
                  pl.BlockSpec((1, 1, hid), lambda l: (l, 0, 0)),
                  pl.BlockSpec((1, hid, hid), lambda l: (l, 0, 0)),
                  pl.BlockSpec((1, 1, hid), lambda l: (l, 0, 0)),
                  pl.BlockSpec((1, 1, 1), lambda l: (l, 0, 0)),
                  pl.BlockSpec((1, 1, hid), lambda l: (l, 0, 0)),
                  pl.BlockSpec((1, 1, hid), lambda l: (l, 0, 0)),
                  pl.BlockSpec((1, 1, hid), lambda l: (l, 0, 0)),
                  pl.BlockSpec((1, 1, hid), lambda l: (l, 0, 0))],
        out_specs=pl.BlockSpec((N_pad, hid), lambda l: (0, 0)),
        scratch_shapes=[pltpu.VMEM((N_pad, hid), jnp.float32),
                        pltpu.VMEM((E_pad, N_pad), jnp.bfloat16),
                        pltpu.VMEM((N_pad, E_pad), jnp.bfloat16),
                        pltpu.SemaphoreType.DMA((2,))],
        compiler_params=cparams_arb,
        cost_estimate=gine_cost,
    )(h1, S, T_t, ea, Lp['wl'], Lp['bl'], Lp['w1'], Lp['b1'], Lp['w2'], Lp['b2'],
      Lp['eps'], Lp['gamma'], Lp['beta'], Lp['mean'], Lp['var'])

    # ---- 5. GlobalAttention pooling + out_lin (node-tiled accumulation) -----------------
    out = pl.pallas_call(
        pool_out_kernel,
        out_shape=jax.ShapeDtypeStruct((G, out_dim), jnp.float32),
        grid=(n_grid,),
        in_specs=[pl.BlockSpec((node_tile, hid), lambda i: (i, 0)),
                  pl.BlockSpec((node_tile, G), lambda i: (i, 0)),
                  pl.BlockSpec((hid, hid // 2), lambda i: (0, 0)),
                  pl.BlockSpec((1, hid // 2), lambda i: (0, 0)),
                  pl.BlockSpec((1, hid // 2), lambda i: (0, 0)),
                  pl.BlockSpec((1, 1), lambda i: (0, 0)),
                  pl.BlockSpec((hid, out_dim), lambda i: (0, 0)),
                  pl.BlockSpec((1, out_dim), lambda i: (0, 0))],
        out_specs=pl.BlockSpec((G, out_dim), lambda i: (0, 0)),
        scratch_shapes=[pltpu.VMEM((G, hid), jnp.float32),
                        pltpu.VMEM((G, 1), jnp.float32)],
        compiler_params=cparams_arb,
    )(h2, Bm, params['wg1'], params['bg1'], params['wg2_row'], params['bg2'],
      params['wout'], params['bout'])
    return out


# ------------------------------------------------------------------------------- main
if __name__ == "__main__":
    in_dim, hid_dim, out_dim, edge_dim = 10, 32, 8, 8
    n_layers, pe_dim, num_heads = 2, 6, 4
    nodes_per_graph, num_graphs = 8, 2
    N = nodes_per_graph * num_graphs

    # two undirected ring graphs of 8 nodes each
    edges = []
    for g in range(num_graphs):
        off = g * nodes_per_graph
        for i in range(nodes_per_graph):
            a, b = off + i, off + (i + 1) % nodes_per_graph
            edges.append((a, b))
            edges.append((b, a))
    edge_index = np.array(edges, dtype=np.int32).T            # [2, 32]
    batch = np.repeat(np.arange(num_graphs, dtype=np.int32), nodes_per_graph)  # [16]

    key = jax.random.PRNGKey(0)
    kx, ke, kp = jax.random.split(key, 3)
    x = jax.random.normal(kx, (N, in_dim), jnp.float32)
    edge_attr = jax.random.normal(ke, (edge_index.shape[1], edge_dim), jnp.float32)

    params = init_params(kp, in_dim, hid_dim, out_dim, edge_dim,
                         n_layers, pe_dim, num_heads)

    out = graph_encoder_forward(params, x, edge_index, edge_attr, batch,
                                pe_dim=pe_dim, heads=num_heads, hid=hid_dim,
                                out_dim=out_dim, edge_dim=edge_dim, n_layers=n_layers)
    out = jax.block_until_ready(out)
    assert out.shape == (num_graphs, out_dim)
    assert bool(jnp.all(jnp.isfinite(out)))
    print("KERNEL_OK")
</pallas_src>

<mosaic_0001>
module attributes {stable_mosaic.version = 11 : i64} {
  func.func @node_proj_kernel(%arg0: i32, %arg1: memref<16x16xf32, #tpu.memory_space<vmem>>, %arg2: memref<16x32xf32, #tpu.memory_space<vmem>>, %arg3: memref<1x32xf32, #tpu.memory_space<vmem>>, %arg4: memref<1x32xf32, #tpu.memory_space<vmem>>, %arg5: memref<1x32xf32, #tpu.memory_space<vmem>>, %arg6: memref<1x32xf32, #tpu.memory_space<vmem>>, %arg7: memref<1x32xf32, #tpu.memory_space<vmem>>, %arg8: memref<32x128xf32, #tpu.memory_space<vmem>>, %arg9: memref<1x128xf32, #tpu.memory_space<vmem>>, %arg10: memref<32x256xf32, #tpu.memory_space<vmem>>, %arg11: memref<1x256xf32, #tpu.memory_space<vmem>>, %arg12: memref<32x32xf32, #tpu.memory_space<vmem>>, %arg13: memref<1x32xf32, #tpu.memory_space<vmem>>, %arg14: memref<16x128xbf16, #tpu.memory_space<vmem>>, %arg15: memref<16x256xbf16, #tpu.memory_space<vmem>>, %arg16: memref<16x32xf32, #tpu.memory_space<vmem>>) attributes {dimension_semantics = [#tpu.dimension_semantics<parallel>], iteration_bounds = array<i64: 1>, scalar_prefetch = 0 : i64, scratch_operands = 0 : i64, tpu.core_type = #tpu.core_type<tc>, window_params = [{transform_indices = @transform_0, window_bounds = array<i64: 16, 16>}, {pipeline_mode = #tpu.pipeline_mode<synchronous>, transform_indices = @transform_1, window_bounds = array<i64: 16, 32>}, {pipeline_mode = #tpu.pipeline_mode<synchronous>, transform_indices = @transform_2, window_bounds = array<i64: 1, 32>}, {pipeline_mode = #tpu.pipeline_mode<synchronous>, transform_indices = @transform_3, window_bounds = array<i64: 1, 32>}, {pipeline_mode = #tpu.pipeline_mode<synchronous>, transform_indices = @transform_4, window_bounds = array<i64: 1, 32>}, {pipeline_mode = #tpu.pipeline_mode<synchronous>, transform_indices = @transform_5, window_bounds = array<i64: 1, 32>}, {pipeline_mode = #tpu.pipeline_mode<synchronous>, transform_indices = @transform_6, window_bounds = array<i64: 1, 32>}, {pipeline_mode = #tpu.pipeline_mode<synchronous>, transform_indices = @transform_7, window_bounds = array<i64: 32, 128>}, {pipeline_mode = #tpu.pipeline_mode<synchronous>, transform_indices = @transform_8, window_bounds = array<i64: 1, 128>}, {pipeline_mode = #tpu.pipeline_mode<synchronous>, transform_indices = @transform_9, window_bounds = array<i64: 32, 256>}, {pipeline_mode = #tpu.pipeline_mode<synchronous>, transform_indices = @transform_10, window_bounds = array<i64: 1, 256>}, {pipeline_mode = #tpu.pipeline_mode<synchronous>, transform_indices = @transform_11, window_bounds = array<i64: 32, 32>}, {pipeline_mode = #tpu.pipeline_mode<synchronous>, transform_indices = @transform_12, window_bounds = array<i64: 1, 32>}, {transform_indices = @transform_13, window_bounds = array<i64: 16, 128>}, {transform_indices = @transform_14, window_bounds = array<i64: 16, 256>}, {transform_indices = @transform_15, window_bounds = array<i64: 16, 32>}]} {
    %c0 = arith.constant 0 : index
    %c0_0 = arith.constant 0 : index
    %0 = vector.load %arg1[%c0, %c0_0] : memref<16x16xf32, #tpu.memory_space<vmem>>, vector<16x16xf32>
    %c0_1 = arith.constant 0 : index
    %c0_2 = arith.constant 0 : index
    %1 = vector.load %arg2[%c0_1, %c0_2] : memref<16x32xf32, #tpu.memory_space<vmem>>, vector<16x32xf32>
    %2 = arith.truncf %0 : vector<16x16xf32> to vector<16x16xbf16>
    %3 = arith.truncf %1 : vector<16x32xf32> to vector<16x32xbf16>
    %cst = arith.constant dense<0.000000e+00> : vector<16x32xf32>
    %4 = tpu.matmul %2, %3, %cst {dimension_numbers = #tpu.dot_dimension_numbers<[1], [0], [0], [1], [0, 0, 1, 1], [], []>} : vector<16x16xbf16>, vector<16x32xbf16>, vector<16x32xf32> -> vector<16x32xf32>
    %c0_3 = arith.constant 0 : index
    %c0_4 = arith.constant 0 : index
    %5 = vector.load %arg3[%c0_3, %c0_4] : memref<1x32xf32, #tpu.memory_space<vmem>>, vector<1x32xf32>
    %6 = vector.broadcast %5 : vector<1x32xf32> to vector<16x32xf32>
    %7 = arith.addf %4, %6 : vector<16x32xf32>
    %cst_5 = arith.constant 0.000000e+00 : f32
    %8 = vector.broadcast %cst_5 : f32 to vector<16x32xf32>
    %9 = arith.cmpf oge, %7, %8 : vector<16x32xf32>
    %cst_6 = arith.constant 2.000000e-02 : f32
    %10 = vector.broadcast %cst_6 : f32 to vector<16x32xf32>
    %11 = arith.mulf %10, %7 : vector<16x32xf32>
    %12 = arith.select %9, %7, %11 : vector<16x32xi1>, vector<16x32xf32>
    %c0_7 = arith.constant 0 : index
    %c0_8 = arith.constant 0 : index
    %13 = vector.load %arg6[%c0_7, %c0_8] : memref<1x32xf32, #tpu.memory_space<vmem>>, vector<1x32xf32>
    %14 = vector.broadcast %13 : vector<1x32xf32> to vector<16x32xf32>
    %15 = arith.subf %12, %14 : vector<16x32xf32>
    %c0_9 = arith.constant 0 : index
    %c0_10 = arith.constant 0 : index
    %16 = vector.load %arg7[%c0_9, %c0_10] : memref<1x32xf32, #tpu.memory_space<vmem>>, vector<1x32xf32>
    %cst_11 = arith.constant 9.99999974E-6 : f32
    %17 = vector.broadcast %cst_11 : f32 to vector<1x32xf32>
    %18 = arith.addf %16, %17 : vector<1x32xf32>
    %19 = math.rsqrt %18 : vector<1x32xf32>
    %20 = vector.broadcast %19 : vector<1x32xf32> to vector<16x32xf32>
    %21 = arith.mulf %15, %20 : vector<16x32xf32>
    %c0_12 = arith.constant 0 : index
    %c0_13 = arith.constant 0 : index
    %22 = vector.load %arg4[%c0_12, %c0_13] : memref<1x32xf32, #tpu.memory_space<vmem>>, vector<1x32xf32>
    %23 = vector.broadcast %22 : vector<1x32xf32> to vector<16x32xf32>
    %24 = arith.mulf %21, %23 : vector<16x32xf32>
    %c0_14 = arith.constant 0 : index
    %c0_15 = arith.constant 0 : index
    %25 = vector.load %arg5[%c0_14, %c0_15] : memref<1x32xf32, #tpu.memory_space<vmem>>, vector<1x32xf32>
    %26 = vector.broadcast %25 : vector<1x32xf32> to vector<16x32xf32>
    %27 = arith.addf %24, %26 : vector<16x32xf32>
    %c0_16 = arith.constant 0 : index
    %c0_17 = arith.constant 0 : index
    %28 = vector.load %arg8[%c0_16, %c0_17] : memref<32x128xf32, #tpu.memory_space<vmem>>, vector<32x128xf32>
    %29 = arith.truncf %27 : vector<16x32xf32> to vector<16x32xbf16>
    %30 = arith.truncf %28 : vector<32x128xf32> to vector<32x128xbf16>
    %cst_18 = arith.constant dense<0.000000e+00> : vector<16x128xf32>
    %31 = tpu.matmul %29, %30, %cst_18 {dimension_numbers = #tpu.dot_dimension_numbers<[1], [0], [0], [1], [0, 0, 1, 1], [], []>} : vector<16x32xbf16>, vector<32x128xbf16>, vector<16x128xf32> -> vector<16x128xf32>
    %c0_19 = arith.constant 0 : index
    %c0_20 = arith.constant 0 : index
    %32 = vector.load %arg9[%c0_19, %c0_20] : memref<1x128xf32, #tpu.memory_space<vmem>>, vector<1x128xf32>
    %33 = vector.broadcast %32 : vector<1x128xf32> to vector<16x128xf32>
    %34 = arith.addf %31, %33 : vector<16x128xf32>
    %35 = arith.truncf %34 : vector<16x128xf32> to vector<16x128xbf16>
    %c0_21 = arith.constant 0 : index
    %c0_22 = arith.constant 0 : index
    %36 = vector.load %arg14[%c0_21, %c0_22] : memref<16x128xbf16, #tpu.memory_space<vmem>>, vector<16x128xbf16>
    tpu.vector_store %arg14[%c0_21, %c0_22], %35 {strides = array<i32>} : memref<16x128xbf16, #tpu.memory_space<vmem>>, vector<16x128xbf16>,
    %c0_23 = arith.constant 0 : index
    %c0_24 = arith.constant 0 : index
    %37 = vector.load %arg10[%c0_23, %c0_24] : memref<32x256xf32, #tpu.memory_space<vmem>>, vector<32x256xf32>
    %38 = arith.truncf %27 : vector<16x32xf32> to vector<16x32xbf16>
    %39 = arith.truncf %37 : vector<32x256xf32> to vector<32x256xbf16>
    %cst_25 = arith.constant dense<0.000000e+00> : vector<16x256xf32>
    %40 = tpu.matmul %38, %39, %cst_25 {dimension_numbers = #tpu.dot_dimension_numbers<[1], [0], [0], [1], [0, 0, 1, 1], [], []>} : vector<16x32xbf16>, vector<32x256xbf16>, vector<16x256xf32> -> vector<16x256xf32>
    %c0_26 = arith.constant 0 : index
    %c0_27 = arith.constant 0 : index
    %41 = vector.load %arg11[%c0_26, %c0_27] : memref<1x256xf32, #tpu.memory_space<vmem>>, vector<1x256xf32>
    %42 = vector.broadcast %41 : vector<1x256xf32> to vector<16x256xf32>
    %43 = arith.addf %40, %42 : vector<16x256xf32>
    %44 = arith.truncf %43 : vector<16x256xf32> to vector<16x256xbf16>
    %c0_28 = arith.constant 0 : index
    %c0_29 = arith.constant 0 : index
    %45 = vector.load %arg15[%c0_28, %c0_29] : memref<16x256xbf16, #tpu.memory_space<vmem>>, vector<16x256xbf16>
    tpu.vector_store %arg15[%c0_28, %c0_29], %44 {strides = array<i32>} : memref<16x256xbf16, #tpu.memory_space<vmem>>, vector<16x256xbf16>,
    %c0_30 = arith.constant 0 : index
    %c0_31 = arith.constant 0 : index
    %46 = vector.load %arg12[%c0_30, %c0_31] : memref<32x32xf32, #tpu.memory_space<vmem>>, vector<32x32xf32>
    %47 = arith.truncf %27 : vector<16x32xf32> to vector<16x32xbf16>
    %48 = arith.truncf %46 : vector<32x32xf32> to vector<32x32xbf16>
    %cst_32 = arith.constant dense<0.000000e+00> : vector<16x32xf32>
    %49 = tpu.matmul %47, %48, %cst_32 {dimension_numbers = #tpu.dot_dimension_numbers<[1], [0], [0], [1], [0, 0, 1, 1], [], []>} : vector<16x32xbf16>, vector<32x32xbf16>, vector<16x32xf32> -> vector<16x32xf32>
    %c0_33 = arith.constant 0 : index
    %c0_34 = arith.constant 0 : index
    %50 = vector.load %arg13[%c0_33, %c0_34] : memref<1x32xf32, #tpu.memory_space<vmem>>, vector<1x32xf32>
    %51 = vector.broadcast %50 : vector<1x32xf32> to vector<16x32xf32>
    %52 = arith.addf %49, %51 : vector<16x32xf32>
    %c0_35 = arith.constant 0 : index
    %c0_36 = arith.constant 0 : index
    %53 = vector.load %arg16[%c0_35, %c0_36] : memref<16x32xf32, #tpu.memory_space<vmem>>, vector<16x32xf32>
    tpu.vector_store %arg16[%c0_35, %c0_36], %52 {strides = array<i32>} : memref<16x32xf32, #tpu.memory_space<vmem>>, vector<16x32xf32>,
    return
  }
  func.func @transform_0(%arg0: i32) -> (i32, i32) {
    %c0_i32 = arith.constant 0 : i32
    %c0_i32_0 = arith.constant 0 : i32
    return %arg0, %c0_i32 : i32, i32
  }
  func.func @transform_1(%arg0: i32) -> (i32, i32) {
    %c0_i32 = arith.constant 0 : i32
    %c0_i32_0 = arith.constant 0 : i32
    %c0_i32_1 = arith.constant 0 : i32
    return %c0_i32, %c0_i32_0 : i32, i32
  }
  func.func @transform_2(%arg0: i32) -> (i32, i32) {
    %c0_i32 = arith.constant 0 : i32
    %c0_i32_0 = arith.constant 0 : i32
    %c0_i32_1 = arith.constant 0 : i32
    return %c0_i32, %c0_i32_0 : i32, i32
  }
  func.func @transform_3(%arg0: i32) -> (i32, i32) {
    %c0_i32 = arith.constant 0 : i32
    %c0_i32_0 = arith.constant 0 : i32
    %c0_i32_1 = arith.constant 0 : i32
    return %c0_i32, %c0_i32_0 : i32, i32
  }
  func.func @transform_4(%arg0: i32) -> (i32, i32) {
    %c0_i32 = arith.constant 0 : i32
    %c0_i32_0 = arith.constant 0 : i32
    %c0_i32_1 = arith.constant 0 : i32
    return %c0_i32, %c0_i32_0 : i32, i32
  }
  func.func @transform_5(%arg0: i32) -> (i32, i32) {
    %c0_i32 = arith.constant 0 : i32
    %c0_i32_0 = arith.constant 0 : i32
    %c0_i32_1 = arith.constant 0 : i32
    return %c0_i32, %c0_i32_0 : i32, i32
  }
  func.func @transform_6(%arg0: i32) -> (i32, i32) {
    %c0_i32 = arith.constant 0 : i32
    %c0_i32_0 = arith.constant 0 : i32
    %c0_i32_1 = arith.constant 0 : i32
    return %c0_i32, %c0_i32_0 : i32, i32
  }
  func.func @transform_7(%arg0: i32) -> (i32, i32) {
    %c0_i32 = arith.constant 0 : i32
    %c0_i32_0 = arith.constant 0 : i32
    %c0_i32_1 = arith.constant 0 : i32
    return %c0_i32, %c0_i32_0 : i32, i32
  }
  func.func @transform_8(%arg0: i32) -> (i32, i32) {
    %c0_i32 = arith.constant 0 : i32
    %c0_i32_0 = arith.constant 0 : i32
    %c0_i32_1 = arith.constant 0 : i32
    return %c0_i32, %c0_i32_0 : i32, i32
  }
  func.func @transform_9(%arg0: i32) -> (i32, i32) {
    %c0_i32 = arith.constant 0 : i32
    %c0_i32_0 = arith.constant 0 : i32
    %c0_i32_1 = arith.constant 0 : i32
    return %c0_i32, %c0_i32_0 : i32, i32
  }
  func.func @transform_10(%arg0: i32) -> (i32, i32) {
    %c0_i32 = arith.constant 0 : i32
    %c0_i32_0 = arith.constant 0 : i32
    %c0_i32_1 = arith.constant 0 : i32
    return %c0_i32, %c0_i32_0 : i32, i32
  }
  func.func @transform_11(%arg0: i32) -> (i32, i32) {
    %c0_i32 = arith.constant 0 : i32
    %c0_i32_0 = arith.constant 0 : i32
    %c0_i32_1 = arith.constant 0 : i32
    return %c0_i32, %c0_i32_0 : i32, i32
  }
  func.func @transform_12(%arg0: i32) -> (i32, i32) {
    %c0_i32 = arith.constant 0 : i32
    %c0_i32_0 = arith.constant 0 : i32
    %c0_i32_1 = arith.constant 0 : i32
    return %c0_i32, %c0_i32_0 : i32, i32
  }
  func.func @transform_13(%arg0: i32) -> (i32, i32) {
    %c0_i32 = arith.constant 0 : i32
    %c0_i32_0 = arith.constant 0 : i32
    return %arg0, %c0_i32 : i32, i32
  }
  func.func @transform_14(%arg0: i32) -> (i32, i32) {
    %c0_i32 = arith.constant 0 : i32
    %c0_i32_0 = arith.constant 0 : i32
    return %arg0, %c0_i32 : i32, i32
  }
  func.func @transform_15(%arg0: i32) -> (i32, i32) {
    %c0_i32 = arith.constant 0 : i32
    %c0_i32_0 = arith.constant 0 : i32
    return %arg0, %c0_i32 : i32, i32
  }
}

</mosaic_0001>

<llo_original>
// kernel: tpu_custom_call.1
$region0: #{tpu_custom_call.1}
  #allocation0 [shape = 'u32[]', space=smem, size = 0x4, offset = 0x4, fixed_abs, tag = 'smem constant byte address 0x4 - core index']
  #allocation1 [shape = 'u32[144,128]{1,0:T(1,128)}', space=vmem, size = 0x12000, scoped, tag = 'internal scratch']
  %s0 = inlined_call_operand.hbm [shape: f32[16,16], index: 0, kind: input, shape index: {}]
  %s1 = inlined_call_operand.hbm [shape: f32[16,32], index: 1, kind: input, shape index: {}]
  %s2 = inlined_call_operand.vmem [shape: f32[1,32], index: 2, kind: input, shape index: {}]
  %s3 = inlined_call_operand.vmem [shape: f32[1,32], index: 3, kind: input, shape index: {}]
  %s4 = inlined_call_operand.vmem [shape: f32[1,32], index: 4, kind: input, shape index: {}]
  %s5 = inlined_call_operand.vmem [shape: f32[1,32], index: 5, kind: input, shape index: {}]
  %s6 = inlined_call_operand.vmem [shape: f32[1,32], index: 6, kind: input, shape index: {}]
  %s7 = inlined_call_operand.hbm [shape: f32[32,128], index: 7, kind: input, shape index: {}]
  %s8 = inlined_call_operand.vmem [shape: f32[1,128], index: 8, kind: input, shape index: {}]
  %s9 = inlined_call_operand.hbm [shape: f32[32,256], index: 9, kind: input, shape index: {}]
  %s10 = inlined_call_operand.vmem [shape: f32[1,256], index: 10, kind: input, shape index: {}]
  %s11 = inlined_call_operand.vmem [shape: f32[32,32], index: 11, kind: input, shape index: {}]
  %s12 = inlined_call_operand.vmem [shape: f32[1,32], index: 12, kind: input, shape index: {}]
  %s13 = inlined_call_operand.hbm [shape: bf16[16,128], index: 13, kind: output, shape index: {0}]
  %s14 = inlined_call_operand.hbm [shape: bf16[16,256], index: 14, kind: output, shape index: {1}]
  %s15 = inlined_call_operand.hbm [shape: f32[16,32], index: 15, kind: output, shape index: {2}]
  %16 = xla_tuple %s13, %s14, %s15
  %s17 = sld [smem:[#allocation0]]
  $region94: #{tpu_custom_call.1} parent=0
    _
  %s19 = ssub.s32 1, %s17
  %s20 = scalar_select 0, %s19, %s17
  $region1: #{tpu_custom_call.1} parent=0
    #allocation2 [shape = 'u8[8192]{0}', space=vmem, size = 0x2000, scoped, tag = 'input window, operand 0, single buffered']
    #allocation3 [shape = 's32[1]{0}', space=sflag, size = 0x4, scoped, tag = 'scoped memory for tpu_custom_call.1']
    #allocation4 [shape = 's32[1]{0}', space=sflag, size = 0x4, scoped, tag = 'scoped memory for tpu_custom_call.1']
    #allocation5 [shape = 'u8[8192]{0}', space=vmem, size = 0x2000, scoped, tag = 'input window, operand 1, single buffered']
    #allocation6 [shape = 's32[1]{0}', space=sflag, size = 0x4, scoped, tag = 'scoped memory for tpu_custom_call.1']
    #allocation7 [shape = 'u8[16384]{0}', space=vmem, size = 0x4000, scoped, tag = 'input window, operand 7, single buffered']
    #allocation8 [shape = 'u8[32768]{0}', space=vmem, size = 0x8000, scoped, tag = 'input window, operand 9, single buffered']
    #allocation9 [shape = 's32[1]{0}', space=sflag, size = 0x4, scoped, tag = 'scoped memory for tpu_custom_call.1']
    #allocation10 [shape = 'u8[4096]{0}', space=vmem, size = 0x1000, scoped, tag = 'output window, operand 0, single buffered']
    #allocation11 [shape = 'u8[8192]{0}', space=vmem, size = 0x2000, scoped, tag = 'output window, operand 1, single buffered']
    #allocation12 [shape = 's32[1]{0}', space=sflag, size = 0x4, scoped, tag = 'scoped memory for tpu_custom_call.1']
    #allocation13 [shape = 'u8[8192]{0}', space=vmem, size = 0x2000, scoped, tag = 'output window, operand 2, single buffered']
    %21 = vsyncpa [#allocation3], 0
    %22 = vsyncpa [#allocation6], 0
    %23 = vsyncpa [#allocation9], 0
    %24 = vsyncpa [#allocation4], 0
    %25 = vsyncpa [#allocation12], 0
    // Predicated region
    $region2: #{tpu_custom_call.1} parent=1 // pred_check
      _
    $region3: #{tpu_custom_call.1} parent=1 // pred_check_branch
      %27 = sbr.rel (0) target = $region5
    $region4: #{tpu_custom_call.1} parent=1 // pred_region
      %s29 = ssub.s32 256, 256
      %30 = vsyncadd [#allocation3], %s29
      %s31 = sshll.u32 [#allocation2], 4
      %s32 = int_to_ptr.vmem [resolvable:$true] %s31
      %37 = dma.hbm_to_vmem [thread:$0]  %s0, 256, %s32, [#allocation3], 128, 128, 8
    $region5: #{tpu_custom_call.1} parent=1 // pred_fallthru
      _
    // Predicated region
    $region6: #{tpu_custom_call.1} parent=1 // pred_check
      _
    $region7: #{tpu_custom_call.1} parent=1 // pred_check_branch
      %39 = sbr.rel (0) target = $region9
    $region8: #{tpu_custom_call.1} parent=1 // pred_region
      %s41 = ssub.s32 256, 256
      %42 = vsyncadd [#allocation6], %s41
      %s43 = sshll.u32 [#allocation5], 4
      %s44 = int_to_ptr.vmem [resolvable:$true] %s43
      %49 = dma.hbm_to_vmem [thread:$0]  %s1, 256, %s44, [#allocation6], 128, 128, 8
    $region9: #{tpu_custom_call.1} parent=1 // pred_fallthru
      _
    // Predicated region
    $region10: #{tpu_custom_call.1} parent=1 // pred_check
      _
    $region11: #{tpu_custom_call.1} parent=1 // pred_check_branch
      %51 = sbr.rel (0) target = $region13
    $region12: #{tpu_custom_call.1} parent=1 // pred_region
      _
    $region13: #{tpu_custom_call.1} parent=1 // pred_fallthru
      _
    // Predicated region
    $region14: #{tpu_custom_call.1} parent=1 // pred_check
      _
    $region15: #{tpu_custom_call.1} parent=1 // pred_check_branch
      %53 = sbr.rel (0) target = $region17
    $region16: #{tpu_custom_call.1} parent=1 // pred_region
      _
    $region17: #{tpu_custom_call.1} parent=1 // pred_fallthru
      _
    // Predicated region
    $region18: #{tpu_custom_call.1} parent=1 // pred_check
      _
    $region19: #{tpu_custom_call.1} parent=1 // pred_check_branch
      %55 = sbr.rel (0) target = $region21
    $region20: #{tpu_custom_call.1} parent=1 // pred_region
      _
    $region21: #{tpu_custom_call.1} parent=1 // pred_fallthru
      _
    // Predicated region
    $region22: #{tpu_custom_call.1} parent=1 // pred_check
      _
    $region23: #{tpu_custom_call.1} parent=1 // pred_check_branch
      %57 = sbr.rel (0) target = $region25
    $region24: #{tpu_custom_call.1} parent=1 // pred_region
      _
    $region25: #{tpu_custom_call.1} parent=1 // pred_fallthru
      _
    // Predicated region
    $region26: #{tpu_custom_call.1} parent=1 // pred_check
      _
    $region27: #{tpu_custom_call.1} parent=1 // pred_check_branch
      %59 = sbr.rel (0) target = $region29
    $region28: #{tpu_custom_call.1} parent=1 // pred_region
      _
    $region29: #{tpu_custom_call.1} parent=1 // pred_fallthru
      _
    // Predicated region
    $region30: #{tpu_custom_call.1} parent=1 // pred_check
      _
    $region31: #{tpu_custom_call.1} parent=1 // pred_check_branch
      %61 = sbr.rel (0) target = $region33
    $region32: #{tpu_custom_call.1} parent=1 // pred_region
      %s63 = ssub.s32 512, 512
      %64 = vsyncadd [#allocation6], %s63
      %s65 = sshll.u32 [#allocation7], 4
      %s66 = int_to_ptr.vmem [resolvable:$true] %s65
      %71 = dma.hbm_to_vmem [thread:$0]  %s7, 512, %s66, [#allocation6], 128, 128, 8
    $region33: #{tpu_custom_call.1} parent=1 // pred_fallthru
      _
    // Predicated region
    $region34: #{tpu_custom_call.1} parent=1 // pred_check
      _
    $region35: #{tpu_custom_call.1} parent=1 // pred_check_branch
      %73 = sbr.rel (0) target = $region37
    $region36: #{tpu_custom_call.1} parent=1 // pred_region
      _
    $region37: #{tpu_custom_call.1} parent=1 // pred_fallthru
      _
    // Predicated region
    $region38: #{tpu_custom_call.1} parent=1 // pred_check
      _
    $region39: #{tpu_custom_call.1} parent=1 // pred_check_branch
      %75 = sbr.rel (0) target = $region41
    $region40: #{tpu_custom_call.1} parent=1 // pred_region
      %s77 = ssub.s32 1024, 1024
      %78 = vsyncadd [#allocation9], %s77
      %s79 = sshll.u32 [#allocation8], 4
      %s80 = int_to_ptr.vmem [resolvable:$true] %s79
      %85 = dma.hbm_to_vmem [thread:$0]  %s9, 1024, %s80, [#allocation9], 256, 256, 16
    $region41: #{tpu_custom_call.1} parent=1 // pred_fallthru
      _
    // Predicated region
    $region42: #{tpu_custom_call.1} parent=1 // pred_check
      _
    $region43: #{tpu_custom_call.1} parent=1 // pred_check_branch
      %87 = sbr.rel (0) target = $region45
    $region44: #{tpu_custom_call.1} parent=1 // pred_region
      _
    $region45: #{tpu_custom_call.1} parent=1 // pred_fallthru
      _
    // Predicated region
    $region46: #{tpu_custom_call.1} parent=1 // pred_check
      _
    $region47: #{tpu_custom_call.1} parent=1 // pred_check_branch
      %89 = sbr.rel (0) target = $region49
    $region48: #{tpu_custom_call.1} parent=1 // pred_region
      _
    $region49: #{tpu_custom_call.1} parent=1 // pred_fallthru
      _
    // Predicated region
    $region50: #{tpu_custom_call.1} parent=1 // pred_check
      _
    $region51: #{tpu_custom_call.1} parent=1 // pred_check_branch
      %91 = sbr.rel (0) target = $region53
    $region52: #{tpu_custom_call.1} parent=1 // pred_region
      _
    $region53: #{tpu_custom_call.1} parent=1 // pred_fallthru
      _
    // Predicated region
    $region54: #{tpu_custom_call.1} parent=1 // pred_check
      _
    $region55: #{tpu_custom_call.1} parent=1 // pred_check_branch
      %93 = sbr.rel (0) target = $region57
    $region56: #{tpu_custom_call.1} parent=1 // pred_region
      %94 = dma.done [#allocation3], 256
    $region57: #{tpu_custom_call.1} parent=1 // pred_fallthru
      _
    // Predicated region
    $region58: #{tpu_custom_call.1} parent=1 // pred_check
      _
    $region59: #{tpu_custom_call.1} parent=1 // pred_check_branch
      %96 = sbr.rel (0) target = $region61
    $region60: #{tpu_custom_call.1} parent=1 // pred_region
      %97 = dma.done [#allocation6], 256
    $region61: #{tpu_custom_call.1} parent=1 // pred_fallthru
      _
    // Predicated region
    $region62: #{tpu_custom_call.1} parent=1 // pred_check
      _
    $region63: #{tpu_custom_call.1} parent=1 // pred_check_branch
      %99 = sbr.rel (0) target = $region65
    $region64: #{tpu_custom_call.1} parent=1 // pred_region
      %100 = dma.done [#allocation6], 512
    $region65: #{tpu_custom_call.1} parent=1 // pred_fallthru
      _
    // Predicated region
    $region66: #{tpu_custom_call.1} parent=1 // pred_check
      _
    $region67: #{tpu_custom_call.1} parent=1 // pred_check_branch
      %102 = sbr.rel (0) target = $region69
    $region68: #{tpu_custom_call.1} parent=1 // pred_region
      %103 = dma.done [#allocation9], 1024
    $region69: #{tpu_custom_call.1} parent=1 // pred_fallthru
      _
    %v105 = vld [vmem:[#allocation2] sm:$0xff]
    %v106 = vld [vmem:[#allocation2 + $0x8] sm:$0xff]
    %v107 = vld [vmem:[#allocation5] sm:$0xff]
    %v108 = vld [vmem:[#allocation5 + $0x8] sm:$0xff]
    %v109 = vpack.c.bf16 %v106, %v105
    %v110 = vpack.c.bf16 %v108, %v107
    %v111 = vld [vmem:[%s2] sm:$0x1]
    %v113 = vlaneseq
    %v114 = vshrl.u32 %v113, 7
    %v115 = vsub.s32 0, %v114
    %v116 = vrot.slane %v111, %v115
    %vm118 = vcmask 130048
    %v120 = vsel %vm118, %v109, 0
    %122 = vmatprep.subr.bf16.mxu0 0
    %123 = vmatpush1.bf16.msra.mxu0 %v110
    %124 = vmatprep.subr.bf16.mxu0 0
    %125 = vmatpush1.bf16.msra.mxu0 0
    %126 = vmatprep.subr.bf16.mxu0 0
    %127 = vmatpush1.bf16.msra.mxu0 0
    %128 = vmatprep.subr.bf16.mxu0 0
    %129 = vmatpush1.bf16.msra.mxu0 0
    %130 = vmatprep.subr.bf16.mxu0 0
    %131 = vmatpush1.bf16.msra.mxu0 0
    %132 = vmatprep.subr.bf16.mxu0 0
    %133 = vmatpush1.bf16.msra.mxu0 0
    %134 = vmatprep.subr.bf16.mxu0 0
    %135 = vmatpush1.bf16.msra.mxu0 0
    %136 = vmatprep.subr.bf16.mxu0 0
    %137 = vmatpush1.bf16.msra.mxu0 0
    %138 = vmatprep.subr.bf16.mxu0 0
    %139 = vmatpush1.bf16.msra.mxu0 0
    %140 = vmatprep.subr.bf16.mxu0 0
    %141 = vmatpush1.bf16.msra.mxu0 0
    %142 = vmatprep.subr.bf16.mxu0 0
    %143 = vmatpush1.bf16.msra.mxu0 0
    %144 = vmatprep.subr.bf16.mxu0 0
    %145 = vmatpush1.bf16.msra.mxu0 0
    %146 = vmatprep.subr.bf16.mxu0 0
    %147 = vmatpush1.bf16.msra.mxu0 0
    %148 = vmatprep.subr.bf16.mxu0 0
    %149 = vmatpush1.bf16.msra.mxu0 0
    %150 = vmatprep.subr.bf16.mxu0 0
    %151 = vmatpush1.bf16.msra.mxu0 0
    %152 = vmatprep.subr.bf16.mxu0 0
    %153 = vmatpush1.bf16.msra.mxu0 0
    %154 = vmatprep.mubr.bf16.mxu0 0
    %155 = vmatmul.mubr.bf16.gmra.mrb[0].mxu0 %v120
    %v156 = vpop.f32.mrb[0].mxu0
    %v157 = vadd.f32 %v116, %v156
    %v158 = vpop.f32.mrb[0].mxu0
    %v159 = vpop.f32.mrb[0].mxu0
    %v160 = vadd.f32 %v116, %v159
    %v161 = vpop.f32.mrb[0].mxu0
    %162 = vdwg.mxu0
    %vm163 = vcmp.ge.f32.partialorder %v157, 0.0
    %vm164 = vcmp.ge.f32.partialorder %v160, 0.0
    %v165 = vmul.f32 %v157, 0.02
    %v166 = vmul.f32 %v160, 0.02
    %v167 = vsel %vm163, %v157, %v165
    %v168 = vsel %vm164, %v160, %v166
    %v169 = vld [vmem:[%s5] sm:$0x1]
    %v171 = vlaneseq
    %v172 = vshrl.u32 %v171, 7
    %v173 = vsub.s32 0, %v172
    %v174 = vrot.slane %v169, %v173
    %v176 = vsub.f32 %v167, %v174
    %v177 = vsub.f32 %v168, %v174
    %v178 = vld [vmem:[%s6] sm:$0x1]
    %v179 = vadd.f32 %v178, 1e-05
    %v180 = vrsqrt.pop %v179
    %v182 = vlaneseq
    %v183 = vshrl.u32 %v182, 7
    %v184 = vsub.s32 0, %v183
    %v185 = vrot.slane %v180, %v184
    %v187 = vmul.f32 %v176, %v185
    %v188 = vmul.f32 %v177, %v185
    %v189 = vld [vmem:[%s3] sm:$0x1]
    %v191 = vlaneseq
    %v192 = vshrl.u32 %v191, 7
    %v193 = vsub.s32 0, %v192
    %v194 = vrot.slane %v189, %v193
    %v196 = vmul.f32 %v187, %v194
    %v197 = vmul.f32 %v188, %v194
    %v198 = vld [vmem:[%s4] sm:$0x1]
    %v200 = vlaneseq
    %v201 = vshrl.u32 %v200, 7
    %v202 = vsub.s32 0, %v201
    %v203 = vrot.slane %v198, %v202
    %v205 = vadd.f32 %v196, %v203
    %v206 = vadd.f32 %v197, %v203
    %v207 = vld [vmem:[#allocation7] sm:$0xff]
    %v208 = vld [vmem:[#allocation7 + $0x8] sm:$0xff]
    %v209 = vld [vmem:[#allocation7 + $0x10] sm:$0xff]
    %v210 = vld [vmem:[#allocation7 + $0x18] sm:$0xff]
    %v211 = vpack.c.bf16 %v206, %v205
    %v212 = vpack.c.bf16 %v208, %v207
    %v213 = vpack.c.bf16 %v210, %v209
    %v214 = vld [vmem:[%s8] sm:$0x1]
    %v216 = vlaneseq
    %v217 = vshrl.u32 %v216, 7
    %v218 = vsub.s32 0, %v217
    %v219 = vrot.slane %v214, %v218
    %vm221 = vcmask 261120
    %v223 = vsel %vm221, %v211, 0
    %225 = vmatprep.subr.bf16.mxu0 0
    %226 = vmatpush1.bf16.msra.mxu0 %v212
    %227 = vmatprep.subr.bf16.mxu0 0
    %228 = vmatpush1.bf16.msra.mxu0 %v213
    %229 = vmatprep.subr.bf16.mxu0 0
    %230 = vmatpush1.bf16.msra.mxu0 0
    %231 = vmatprep.subr.bf16.mxu0 0
    %232 = vmatpush1.bf16.msra.mxu0 0
    %233 = vmatprep.subr.bf16.mxu0 0
    %234 = vmatpush1.bf16.msra.mxu0 0
    %235 = vmatprep.subr.bf16.mxu0 0
    %236 = vmatpush1.bf16.msra.mxu0 0
    %237 = vmatprep.subr.bf16.mxu0 0
    %238 = vmatpush1.bf16.msra.mxu0 0
    %239 = vmatprep.subr.bf16.mxu0 0
    %240 = vmatpush1.bf16.msra.mxu0 0
    %241 = vmatprep.subr.bf16.mxu0 0
    %242 = vmatpush1.bf16.msra.mxu0 0
    %243 = vmatprep.subr.bf16.mxu0 0
    %244 = vmatpush1.bf16.msra.mxu0 0
    %245 = vmatprep.subr.bf16.mxu0 0
    %246 = vmatpush1.bf16.msra.mxu0 0
    %247 = vmatprep.subr.bf16.mxu0 0
    %248 = vmatpush1.bf16.msra.mxu0 0
    %249 = vmatprep.subr.bf16.mxu0 0
    %250 = vmatpush1.bf16.msra.mxu0 0
    %251 = vmatprep.subr.bf16.mxu0 0
    %252 = vmatpush1.bf16.msra.mxu0 0
    %253 = vmatprep.subr.bf16.mxu0 0
    %254 = vmatpush1.bf16.msra.mxu0 0
    %255 = vmatprep.subr.bf16.mxu0 0
    %256 = vmatpush1.bf16.msra.mxu0 0
    %257 = vmatprep.mubr.bf16.mxu0 0
    %258 = vmatmul.mubr.bf16.gmra.mrb[0].mxu0 %v223
    %v259 = vpop.f32.mrb[0].mxu0
    %v260 = vadd.f32 %v219, %v259
    %v261 = vpop.f32.mrb[0].mxu0
    %v262 = vpop.f32.mrb[0].mxu0
    %v263 = vadd.f32 %v219, %v262
    %v264 = vpop.f32.mrb[0].mxu0
    %265 = vdwg.mxu0
    %v266 = vpack.c.bf16 %v263, %v260
    %v268 = vunpack.c.l.b16 %v266
    %v269 = vunpack.c.h.b16 %v266
    %v270 = vpack.c.b16 %v268, %v268
    %v271 = vpack.c.b16 %v269, %v269
    %274 = vst [vmem:[#allocation10] sm:$0xf] %v270
    %275 = vst [vmem:[#allocation10 + $0x4] sm:$0xf] %v271
    %v276 = vld [vmem:[#allocation8] sm:$0xff]
    %v277 = vld [vmem:[#allocation8 + $0x8] sm:$0xff]
    %v278 = vld [vmem:[#allocation8 + $0x10] sm:$0xff]
    %v279 = vld [vmem:[#allocation8 + $0x18] sm:$0xff]
    %v280 = vld [vmem:[#allocation8 + $0x20] sm:$0xff]
    %v281 = vld [vmem:[#allocation8 + $0x28] sm:$0xff]
    %v282 = vld [vmem:[#allocation8 + $0x30] sm:$0xff]
    %v283 = vld [vmem:[#allocation8 + $0x38] sm:$0xff]
    %v284 = vpack.c.bf16 %v278, %v276
    %v285 = vpack.c.bf16 %v279, %v277
    %v286 = vpack.c.bf16 %v282, %v280
    %v287 = vpack.c.bf16 %v283, %v281
    %v288 = vld [vmem:[%s10] sm:$0x3]
    %v290 = vlaneseq
    %v291 = vshrl.u32 %v290, 7
    %v292 = vsub.s32 0, %v291
    %v293 = vrot.slane %v288, %v292
    %v294 = vlaneseq
    %v295 = vshrl.u32 %v294, 7
    %v296 = vsub.s32 1, %v295
    %v297 = vrot.slane %v288, %v296
    %300 = vmatprep.subr.bf16.mxu0 %v285
    %301 = vmatpush1.bf16.msra.mxu0 %v284
    %302 = vmatprep.subr.bf16.mxu0 %v287
    %303 = vmatpush1.bf16.msra.mxu0 %v286
    %304 = vmatprep.subr.bf16.mxu0 0
    %305 = vmatpush1.bf16.msra.mxu0 0
    %306 = vmatprep.subr.bf16.mxu0 0
    %307 = vmatpush1.bf16.msra.mxu0 0
    %308 = vmatprep.subr.bf16.mxu0 0
    %309 = vmatpush1.bf16.msra.mxu0 0
    %310 = vmatprep.subr.bf16.mxu0 0
    %311 = vmatpush1.bf16.msra.mxu0 0
    %312 = vmatprep.subr.bf16.mxu0 0
    %313 = vmatpush1.bf16.msra.mxu0 0
    %314 = vmatprep.subr.bf16.mxu0 0
    %315 = vmatpush1.bf16.msra.mxu0 0
    %316 = vmatprep.subr.bf16.mxu0 0
    %317 = vmatpush1.bf16.msra.mxu0 0
    %318 = vmatprep.subr.bf16.mxu0 0
    %319 = vmatpush1.bf16.msra.mxu0 0
    %320 = vmatprep.subr.bf16.mxu0 0
    %321 = vmatpush1.bf16.msra.mxu0 0
    %322 = vmatprep.subr.bf16.mxu0 0
    %323 = vmatpush1.bf16.msra.mxu0 0
    %324 = vmatprep.subr.bf16.mxu0 0
    %325 = vmatpush1.bf16.msra.mxu0 0
    %326 = vmatprep.subr.bf16.mxu0 0
    %327 = vmatpush1.bf16.msra.mxu0 0
    %328 = vmatprep.subr.bf16.mxu0 0
    %329 = vmatpush1.bf16.msra.mxu0 0
    %330 = vmatprep.subr.bf16.mxu0 0
    %331 = vmatpush1.bf16.msra.mxu0 0
    %332 = vmatprep.mubr.bf16.mxu0 0
    %333 = vmatmul.mubr.bf16.gmra.mrb[0].mxu0 %v223
    %v334 = vpop.f32.mrb[0].mxu0
    %v335 = vadd.f32 %v293, %v334
    %v336 = vpop.f32.mrb[0].mxu0
    %v337 = vadd.f32 %v297, %v336
    %v338 = vpop.f32.mrb[0].mxu0
    %v339 = vadd.f32 %v293, %v338
    %v340 = vpop.f32.mrb[0].mxu0
    %v341 = vadd.f32 %v297, %v340
    %342 = vdwg.mxu0
    %v343 = vpack.c.bf16 %v339, %v335
    %v344 = vpack.c.bf16 %v341, %v337
    %v347 = vunpack.c.l.b16 %v343
    %v348 = vunpack.c.l.b16 %v344
    %v349 = vunpack.c.h.b16 %v343
    %v350 = vunpack.c.h.b16 %v344
    %v351 = vpack.c.b16 %v348, %v347
    %v352 = vpack.c.b16 %v350, %v349
    %355 = vst [vmem:[#allocation11] sm:$0xff] %v351
    %356 = vst [vmem:[#allocation11 + $0x8] sm:$0xff] %v352
    %v357 = vld [vmem:[%s11] sm:$0xff]
    %v358 = vld [vmem:[%s11 + $0x8] sm:$0xff]
    %v359 = vld [vmem:[%s11 + $0x10] sm:$0xff]
    %v360 = vld [vmem:[%s11 + $0x18] sm:$0xff]
    %v361 = vpack.c.bf16 %v358, %v357
    %v362 = vpack.c.bf16 %v360, %v359
    %v363 = vld [vmem:[%s12] sm:$0x1]
    %v365 = vlaneseq
    %v366 = vshrl.u32 %v365, 7
    %v367 = vsub.s32 0, %v366
    %v368 = vrot.slane %v363, %v367
    %370 = vmatprep.subr.bf16.mxu0 0
    %371 = vmatpush1.bf16.msra.mxu0 %v361
    %372 = vmatprep.subr.bf16.mxu0 0
    %373 = vmatpush1.bf16.msra.mxu0 %v362
    %374 = vmatprep.subr.bf16.mxu0 0
    %375 = vmatpush1.bf16.msra.mxu0 0
    %376 = vmatprep.subr.bf16.mxu0 0
    %377 = vmatpush1.bf16.msra.mxu0 0
    %378 = vmatprep.subr.bf16.mxu0 0
    %379 = vmatpush1.bf16.msra.mxu0 0
    %380 = vmatprep.subr.bf16.mxu0 0
    %381 = vmatpush1.bf16.msra.mxu0 0
    %382 = vmatprep.subr.bf16.mxu0 0
    %383 = vmatpush1.bf16.msra.mxu0 0
    %384 = vmatprep.subr.bf16.mxu0 0
    %385 = vmatpush1.bf16.msra.mxu0 0
    %386 = vmatprep.subr.bf16.mxu0 0
    %387 = vmatpush1.bf16.msra.mxu0 0
    %388 = vmatprep.subr.bf16.mxu0 0
    %389 = vmatpush1.bf16.msra.mxu0 0
    %390 = vmatprep.subr.bf16.mxu0 0
    %391 = vmatpush1.bf16.msra.mxu0 0
    %392 = vmatprep.subr.bf16.mxu0 0
    %393 = vmatpush1.bf16.msra.mxu0 0
    %394 = vmatprep.subr.bf16.mxu0 0
    %395 = vmatpush1.bf16.msra.mxu0 0
    %396 = vmatprep.subr.bf16.mxu0 0
    %397 = vmatpush1.bf16.msra.mxu0 0
    %398 = vmatprep.subr.bf16.mxu0 0
    %399 = vmatpush1.bf16.msra.mxu0 0
    %400 = vmatprep.subr.bf16.mxu0 0
    %401 = vmatpush1.bf16.msra.mxu0 0
    %402 = vmatprep.mubr.bf16.mxu0 0
    %403 = vmatmul.mubr.bf16.gmra.mrb[0].mxu0 %v223
    %v404 = vpop.f32.mrb[0].mxu0
    %v405 = vadd.f32 %v368, %v404
    %v406 = vpop.f32.mrb[0].mxu0
    %v407 = vpop.f32.mrb[0].mxu0
    %v408 = vadd.f32 %v368, %v407
    %v409 = vpop.f32.mrb[0].mxu0
    %410 = vdwg.mxu0
    %411 = vst.msk [vmem:[#allocation13] sm:$0xff] %vm221, %v405
    %412 = vst.msk [vmem:[#allocation13 + $0x8] sm:$0xff] %vm221, %v408
    // Predicated region
    $region70: #{tpu_custom_call.1} parent=1 // pred_check
      _
    $region71: #{tpu_custom_call.1} parent=1 // pred_check_branch
      %414 = sbr.rel (0) target = $region73
    $region72: #{tpu_custom_call.1} parent=1 // pred_region
      %s416 = ssub.s32 128, 128
      %417 = vsyncadd [#allocation4], %s416
      %s418 = sshll.u32 [#allocation10], 4
      %s419 = int_to_ptr.vmem [resolvable:$true] %s418
      %424 = dma.vmem_to_hbm [thread:$0]  %s419, 128, %s13, [#allocation4], 64, 64, 4
    $region73: #{tpu_custom_call.1} parent=1 // pred_fallthru
      _
    // Predicated region
    $region74: #{tpu_custom_call.1} parent=1 // pred_check
      _
    $region75: #{tpu_custom_call.1} parent=1 // pred_check_branch
      %426 = sbr.rel (0) target = $region77
    $region76: #{tpu_custom_call.1} parent=1 // pred_region
      %s428 = ssub.s32 256, 256
      %429 = vsyncadd [#allocation12], %s428
      %s430 = sshll.u32 [#allocation11], 4
      %s431 = int_to_ptr.vmem [resolvable:$true] %s430
      %436 = dma.vmem_to_hbm [thread:$0]  %s431, 256, %s14, [#allocation12], 128, 128, 8
    $region77: #{tpu_custom_call.1} parent=1 // pred_fallthru
      _
    // Predicated region
    $region78: #{tpu_custom_call.1} parent=1 // pred_check
      _
    $region79: #{tpu_custom_call.1} parent=1 // pred_check_branch
      %438 = sbr.rel (0) target = $region81
    $region80: #{tpu_custom_call.1} parent=1 // pred_region
      %s440 = ssub.s32 256, 256
      %441 = vsyncadd [#allocation12], %s440
      %s442 = sshll.u32 [#allocation13], 4
      %s443 = int_to_ptr.vmem [resolvable:$true] %s442
      %448 = dma.vmem_to_hbm [thread:$0]  %s443, 256, %s15, [#allocation12], 128, 128, 8
    $region81: #{tpu_custom_call.1} parent=1 // pred_fallthru
      _
    // Predicated region
    $region82: #{tpu_custom_call.1} parent=1 // pred_check
      _
    $region83: #{tpu_custom_call.1} parent=1 // pred_check_branch
      %450 = sbr.rel (0) target = $region85
    $region84: #{tpu_custom_call.1} parent=1 // pred_region
      %451 = dma.done [#allocation4], 128
    $region85: #{tpu_custom_call.1} parent=1 // pred_fallthru
      _
    // Predicated region
    $region86: #{tpu_custom_call.1} parent=1 // pred_check
      _
    $region87: #{tpu_custom_call.1} parent=1 // pred_check_branch
      %453 = sbr.rel (0) target = $region89
    $region88: #{tpu_custom_call.1} parent=1 // pred_region
      %454 = dma.done [#allocation12], 256
    $region89: #{tpu_custom_call.1} parent=1 // pred_fallthru
      _
    // Predicated region
    $region90: #{tpu_custom_call.1} parent=1 // pred_check
      _
    $region91: #{tpu_custom_call.1} parent=1 // pred_check_branch
      %456 = sbr.rel (0) target = $region93
    $region92: #{tpu_custom_call.1} parent=1 // pred_region
      %457 = dma.done [#allocation12], 256
    $region93: #{tpu_custom_call.1} parent=1 // pred_fallthru
      _
    %458 = vsyncpa [#allocation3], 1
    %459 = vsyncpa [#allocation6], 1
    %460 = vsyncpa [#allocation9], 1
    %461 = vsyncpa [#allocation4], 1
    %462 = vsyncpa [#allocation12], 1

</llo_original>
